<compile_context>
chip_gen: v7x
topology: tpu7x:2x2x1
jax: 0.10.0
libtpu: 0.0.40
codegen_flags: <defaults>
</compile_context>

<pallas_src>
import functools

import jax
import jax.numpy as jnp
from jax.experimental import pallas as pl
from jax.experimental.pallas import tpu as pltpu


# ---------------------------------------------------------------------------
# helpers
# ---------------------------------------------------------------------------
def _round_up(x, m):
    return ((x + m - 1) // m) * m


def _choose_tile(dim, target, align=128):
    """Tile size (multiple of `align`, <= target) with bounded zero-padding.

    Unlike the old version (which rounded the padded dim up to a multiple of
    a fixed target and could inflate it by ~2x), this picks the largest tile
    <= target whose padding waste stays within ~12.5% of the aligned dim,
    falling back to `align` (zero waste) otherwise.
    """
    padded0 = _round_up(dim, align)
    if padded0 <= target:
        return padded0, padded0
    slack = padded0 // 8
    tile = (target // align) * align
    while tile > align:
        if _round_up(padded0, tile) - padded0 <= slack:
            break
        tile -= align
    return tile, _round_up(padded0, tile)


def _pad2d(x, rows, cols):
    r, c = x.shape
    if r == rows and c == cols:
        return x
    return jnp.pad(x, ((0, rows - r), (0, cols - c)))


# ---------------------------------------------------------------------------
# Fused GCN hop kernel: one pass over adj produces BOTH hop outputs
# ---------------------------------------------------------------------------
def _fused_hop_kernel(adj_ref, ulat_ref, ilat_ref, uo_ref, io_ref, *, ti):
    ui = pl.program_id(0)   # user-tile axis (outer)
    ij = pl.program_id(1)   # item-tile axis (inner, "arbitrary")

    # u-output block is resident across the inner item axis -> init at ij==0.
    @pl.when(ij == 0)
    def _():
        uo_ref[...] = jnp.zeros_like(uo_ref)

    # i-output block is resident across the WHOLE grid -> init at (0, 0).
    @pl.when(jnp.logical_and(ui == 0, ij == 0))
    def _():
        io_ref[...] = jnp.zeros_like(io_ref)

    a = adj_ref[...]                                   # (tu, ti) bf16
    row = pl.multiple_of(ij * ti, ti)                  # aligned item offset
    ilat_blk = ilat_ref[pl.ds(row, ti), :]             # (ti, D) from resident ilat

    # temulat contribution: adj @ ilat     (MXU, f32 accumulation)
    uo_ref[...] += jnp.dot(a, ilat_blk, preferred_element_type=jnp.float32)

    # temilat contribution: adj.T @ ulat   (contract adj dim 0; no transpose in HBM)
    io_ref[pl.ds(row, ti), :] += jax.lax.dot_general(
        a,
        ulat_ref[...],
        dimension_numbers=(((0,), (0,)), ((), ())),
        preferred_element_type=jnp.float32,
    )


def fused_gcn_hop(adj_p, ulat_p, ilat_p, *, tu, ti):
    """One LightGCN hop on padded buffers.

    adj_p : (U_pad, I_pad) bf16   (cast + padded once, reused every hop)
    ulat_p: (U_pad, D_pad) bf16   ilat_p: (I_pad, D_pad) bf16
    Returns (adj @ ilat, adj.T @ ulat) as padded f32 arrays.
    """
    U_pad, I_pad = adj_p.shape
    D_pad = ulat_p.shape[1]
    grid = (U_pad // tu, I_pad // ti)

    # VMEM budget: double-buffered streamed operands + resident blocks.
    vmem_need = (
        2 * tu * ti * 2          # adj tile (bf16, double-buffered)
        + 2 * tu * D_pad * 2     # ulat tile (bf16)
        + 2 * I_pad * D_pad * 2  # ilat resident (bf16)
        + 2 * tu * D_pad * 4     # u output block (f32)
        + 2 * I_pad * D_pad * 4  # i output block (f32, grid-resident)
    )
    # Cap at 64 MiB so the same tile plan stays inside v7x's physical VMEM.
    vmem_limit = int(min(max(2 * vmem_need, 32 << 20), 64 << 20))

    u_out, i_out = pl.pallas_call(
        functools.partial(_fused_hop_kernel, ti=ti),
        out_shape=(
            jax.ShapeDtypeStruct((U_pad, D_pad), jnp.float32),
            jax.ShapeDtypeStruct((I_pad, D_pad), jnp.float32),
        ),
        grid_spec=pltpu.PrefetchScalarGridSpec(
            num_scalar_prefetch=0,
            grid=grid,
            in_specs=[
                # adj: streamed exactly once per hop
                pl.BlockSpec((tu, ti), lambda i, j: (i, j)),
                # ulat: fetched once per U tile (index depends only on outer axis)
                pl.BlockSpec((tu, D_pad), lambda i, j: (i, 0)),
                # ilat: fully VMEM-resident, sliced in-kernel with pl.ds
                pl.BlockSpec((I_pad, D_pad), lambda i, j: (0, 0)),
            ],
            out_specs=(
                # u out: resident across the inner item axis
                pl.BlockSpec((tu, D_pad), lambda i, j: (i, 0)),
                # i out: resident across the entire grid (f32 accumulator)
                pl.BlockSpec((I_pad, D_pad), lambda i, j: (0, 0)),
            ),
        ),
        compiler_params=pltpu.CompilerParams(
            # The grid-resident i-accumulator forbids splitting any grid axis
            # across TensorCores -> both axes "arbitrary".
            dimension_semantics=("arbitrary", "arbitrary"),
            vmem_limit_bytes=vmem_limit,
        ),
    )(adj_p, ulat_p, ilat_p)
    return u_out, i_out


# ---------------------------------------------------------------------------
# LightGCN forward (glue in JAX, hop matmuls fused in Pallas)
# ---------------------------------------------------------------------------
@functools.partial(jax.jit, static_argnames=("gcn_hops",))
def lightgcn_forward(adj, u_embeds, i_embeds, gcn_hops):
    U, D = u_embeds.shape
    I = i_embeds.shape[0]

    tu, U_pad = _choose_tile(U, 1024)
    ti, I_pad = _choose_tile(I, 512)
    D_pad = _round_up(D, 128)

    # Hoisted: cast adj to bf16 and zero-pad ONCE; reused by all hops.
    adj_p = _pad2d(adj.astype(jnp.bfloat16), U_pad, I_pad)

    # Keep lats padded throughout the loop (zero padding is exact for matmul).
    ulat = _pad2d(u_embeds, U_pad, D_pad)
    ilat = _pad2d(i_embeds, I_pad, D_pad)

    u_sum = jnp.zeros((U_pad, D_pad), jnp.float32)
    i_sum = jnp.zeros((I_pad, D_pad), jnp.float32)
    for _ in range(gcn_hops):
        # Both hop outputs from one pass over adj; both use the *previous*
        # hop's lats (matches the torch loop: computed before appending).
        u_new, i_new = fused_gcn_hop(
            adj_p,
            ulat.astype(jnp.bfloat16),
            ilat.astype(jnp.bfloat16),
            tu=tu,
            ti=ti,
        )
        u_sum = u_sum + u_new
        i_sum = i_sum + i_new
        ulat, ilat = u_new, i_new

    u_out = u_sum[:U, :D] + u_embeds
    i_out = i_sum[:I, :D] + i_embeds
    return u_out, i_out


# ---------------------------------------------------------------------------
# References (bf16-recipe and full-f32) for validation
# ---------------------------------------------------------------------------
def ref_forward(adj, u_embeds, i_embeds, gcn_hops, dtype=jnp.bfloat16):
    def spmm(a, b, transpose_a=False):
        a = a.astype(dtype)
        b = b.astype(dtype)
        if transpose_a:
            return jax.lax.dot_general(
                a, b, (((0,), (0,)), ((), ())),
                preferred_element_type=jnp.float32)
        return jnp.dot(a, b, preferred_element_type=jnp.float32)

    ulats, ilats = [u_embeds], [i_embeds]
    for _ in range(gcn_hops):
        temulat = spmm(adj, ilats[-1], transpose_a=False)
        temilat = spmm(adj, ulats[-1], transpose_a=True)
        ulats.append(temulat)
        ilats.append(temilat)
    return sum(ulats[1:]) + u_embeds, sum(ilats[1:]) + i_embeds


# ---------------------------------------------------------------------------
# Deterministic parameter / input construction
# ---------------------------------------------------------------------------
def xavier_uniform(key, shape, dtype=jnp.float32):
    fan_out, fan_in = shape
    bound = (6.0 / (fan_in + fan_out)) ** 0.5
    return jax.random.uniform(key, shape, dtype, minval=-bound, maxval=bound)


if __name__ == "__main__":
    # small synthetic "args": user=256, item=192, latdim=128, gcn_hops=2
    USER, ITEM, LATDIM, GCN_HOPS = 256, 192, 128, 2

    key = jax.random.PRNGKey(0)
    k_u, k_i, k_adj = jax.random.split(key, 3)

    u_embeds = xavier_uniform(k_u, (USER, LATDIM))
    i_embeds = xavier_uniform(k_i, (ITEM, LATDIM))

    # synthetic sparse-ish bipartite interaction graph, symmetrically normalized
    mask = (jax.random.uniform(k_adj, (USER, ITEM)) < 0.05).astype(jnp.float32)
    deg_u = jnp.clip(mask.sum(axis=1, keepdims=True), 1.0)
    deg_i = jnp.clip(mask.sum(axis=0, keepdims=True), 1.0)
    adj = mask / jnp.sqrt(deg_u) / jnp.sqrt(deg_i)  # (U, I); tpAdj = adj.T (never materialized)

    u_out, i_out = lightgcn_forward(adj, u_embeds, i_embeds, GCN_HOPS)
    jax.block_until_ready((u_out, i_out))

    assert u_out.shape == (USER, LATDIM) and i_out.shape == (ITEM, LATDIM)

    # Same-recipe (bf16 operands, f32 accumulate) reference: tight tolerance.
    u_bf, i_bf = ref_forward(adj, u_embeds, i_embeds, GCN_HOPS, jnp.bfloat16)
    assert jnp.allclose(u_out, u_bf, atol=1e-3, rtol=1e-2), "user lat mismatch (bf16 ref)"
    assert jnp.allclose(i_out, i_bf, atol=1e-3, rtol=1e-2), "item lat mismatch (bf16 ref)"

    # Full-f32 reference (what torch.spmm computes): loose tolerance to bound
    # the bf16-operand precision loss.
    u_f32, i_f32 = ref_forward(adj, u_embeds, i_embeds, GCN_HOPS, jnp.float32)
    assert jnp.allclose(u_out, u_f32, atol=5e-2, rtol=5e-2), "user lat mismatch (f32 ref)"
    assert jnp.allclose(i_out, i_f32, atol=5e-2, rtol=5e-2), "item lat mismatch (f32 ref)"

    print("KERNEL_OK")
</pallas_src>

<mosaic_0001>
module attributes {stable_mosaic.version = 11 : i64} {
  func.func @_fused_hop_kernel(%arg0: i32, %arg1: i32, %arg2: memref<256x256xbf16, #tpu.memory_space<vmem>>, %arg3: memref<256x128xbf16, #tpu.memory_space<vmem>>, %arg4: memref<256x128xbf16, #tpu.memory_space<vmem>>, %arg5: memref<256x128xf32, #tpu.memory_space<vmem>>, %arg6: memref<256x128xf32, #tpu.memory_space<vmem>>) attributes {dimension_semantics = [#tpu.dimension_semantics<arbitrary>, #tpu.dimension_semantics<arbitrary>], iteration_bounds = array<i64: 1, 1>, scalar_prefetch = 0 : i64, scratch_operands = 0 : i64, tpu.core_type = #tpu.core_type<tc>, window_params = [{transform_indices = @transform_0, window_bounds = array<i64: 256, 256>}, {transform_indices = @transform_1, window_bounds = array<i64: 256, 128>}, {pipeline_mode = #tpu.pipeline_mode<synchronous>, transform_indices = @transform_2, window_bounds = array<i64: 256, 128>}, {transform_indices = @transform_3, window_bounds = array<i64: 256, 128>}, {pipeline_mode = #tpu.pipeline_mode<synchronous>, transform_indices = @transform_4, window_bounds = array<i64: 256, 128>}]} {
    %c0_i32 = arith.constant 0 : i32
    %0 = arith.cmpi eq, %arg1, %c0_i32 : i32
    %1 = arith.extui %0 : i1 to i32
    %c0_i32_0 = arith.constant 0 : i32
    %2 = arith.cmpi ne, %1, %c0_i32_0 : i32
    scf.if %2 {
      %cst_15 = arith.constant 0.000000e+00 : f32
      %24 = vector.broadcast %cst_15 : f32 to vector<256x128xf32>
      %c0_16 = arith.constant 0 : index
      %c0_17 = arith.constant 0 : index
      %25 = vector.load %arg5[%c0_16, %c0_17] : memref<256x128xf32, #tpu.memory_space<vmem>>, vector<256x128xf32>
      tpu.vector_store %arg5[%c0_16, %c0_17], %24 {strides = array<i32>} : memref<256x128xf32, #tpu.memory_space<vmem>>, vector<256x128xf32>,
    } else {
    }
    %c0_i32_1 = arith.constant 0 : i32
    %3 = arith.cmpi eq, %arg0, %c0_i32_1 : i32
    %c0_i32_2 = arith.constant 0 : i32
    %4 = arith.cmpi eq, %arg1, %c0_i32_2 : i32
    %5 = arith.andi %3, %4 : i1
    %6 = arith.extui %5 : i1 to i32
    %c0_i32_3 = arith.constant 0 : i32
    %7 = arith.cmpi ne, %6, %c0_i32_3 : i32
    scf.if %7 {
      %cst_15 = arith.constant 0.000000e+00 : f32
      %24 = vector.broadcast %cst_15 : f32 to vector<256x128xf32>
      %c0_16 = arith.constant 0 : index
      %c0_17 = arith.constant 0 : index
      %25 = vector.load %arg6[%c0_16, %c0_17] : memref<256x128xf32, #tpu.memory_space<vmem>>, vector<256x128xf32>
      tpu.vector_store %arg6[%c0_16, %c0_17], %24 {strides = array<i32>} : memref<256x128xf32, #tpu.memory_space<vmem>>, vector<256x128xf32>,
    } else {
    }
    %c0 = arith.constant 0 : index
    %c0_4 = arith.constant 0 : index
    %8 = vector.load %arg2[%c0, %c0_4] : memref<256x256xbf16, #tpu.memory_space<vmem>>, vector<256x256xbf16>
    %c256_i32 = arith.constant 256 : i32
    %9 = arith.muli %arg1, %c256_i32 : i32
    %10 = tpu.assume_multiple %9, 256 : i32
    %11 = arith.index_cast %10 : i32 to index
    %c0_5 = arith.constant 0 : index
    %12 = vector.load %arg4[%11, %c0_5] : memref<256x128xbf16, #tpu.memory_space<vmem>>, vector<256x128xbf16>
    %c0_6 = arith.constant 0 : index
    %c0_7 = arith.constant 0 : index
    %13 = vector.load %arg5[%c0_6, %c0_7] : memref<256x128xf32, #tpu.memory_space<vmem>>, vector<256x128xf32>
    %cst = arith.constant dense<0.000000e+00> : vector<256x128xf32>
    %14 = tpu.matmul %8, %12, %cst {dimension_numbers = #tpu.dot_dimension_numbers<[1], [0], [0], [1], [0, 0, 1, 1], [], []>} : vector<256x256xbf16>, vector<256x128xbf16>, vector<256x128xf32> -> vector<256x128xf32>
    %15 = arith.addf %13, %14 : vector<256x128xf32>
    %c0_8 = arith.constant 0 : index
    %c0_9 = arith.constant 0 : index
    %16 = vector.load %arg5[%c0_8, %c0_9] : memref<256x128xf32, #tpu.memory_space<vmem>>, vector<256x128xf32>
    tpu.vector_store %arg5[%c0_8, %c0_9], %15 {strides = array<i32>} : memref<256x128xf32, #tpu.memory_space<vmem>>, vector<256x128xf32>,
    %17 = arith.index_cast %10 : i32 to index
    %c0_10 = arith.constant 0 : index
    %18 = vector.load %arg6[%17, %c0_10] : memref<256x128xf32, #tpu.memory_space<vmem>>, vector<256x128xf32>
    %c0_11 = arith.constant 0 : index
    %c0_12 = arith.constant 0 : index
    %19 = vector.load %arg3[%c0_11, %c0_12] : memref<256x128xbf16, #tpu.memory_space<vmem>>, vector<256x128xbf16>
    %cst_13 = arith.constant dense<0.000000e+00> : vector<256x128xf32>
    %20 = tpu.matmul %8, %19, %cst_13 {dimension_numbers = #tpu.dot_dimension_numbers<[0], [0], [1], [1], [0, 1, 1, 1], [], []>} : vector<256x256xbf16>, vector<256x128xbf16>, vector<256x128xf32> -> vector<256x128xf32>
    %21 = arith.addf %18, %20 : vector<256x128xf32>
    %22 = arith.index_cast %10 : i32 to index
    %c0_14 = arith.constant 0 : index
    %23 = vector.load %arg6[%22, %c0_14] : memref<256x128xf32, #tpu.memory_space<vmem>>, vector<256x128xf32>
    tpu.vector_store %arg6[%22, %c0_14], %21 {strides = array<i32>} : memref<256x128xf32, #tpu.memory_space<vmem>>, vector<256x128xf32>,
    return
  }
  func.func @transform_0(%arg0: i32, %arg1: i32) -> (i32, i32) {
    %c0_i32 = arith.constant 0 : i32
    return %arg0, %arg1 : i32, i32
  }
  func.func @transform_1(%arg0: i32, %arg1: i32) -> (i32, i32) {
    %c0_i32 = arith.constant 0 : i32
    %c0_i32_0 = arith.constant 0 : i32
    return %arg0, %c0_i32 : i32, i32
  }
  func.func @transform_2(%arg0: i32, %arg1: i32) -> (i32, i32) {
    %c0_i32 = arith.constant 0 : i32
    %c0_i32_0 = arith.constant 0 : i32
    %c0_i32_1 = arith.constant 0 : i32
    return %c0_i32, %c0_i32_0 : i32, i32
  }
  func.func @transform_3(%arg0: i32, %arg1: i32) -> (i32, i32) {
    %c0_i32 = arith.constant 0 : i32
    %c0_i32_0 = arith.constant 0 : i32
    return %arg0, %c0_i32 : i32, i32
  }
  func.func @transform_4(%arg0: i32, %arg1: i32) -> (i32, i32) {
    %c0_i32 = arith.constant 0 : i32
    %c0_i32_0 = arith.constant 0 : i32
    %c0_i32_1 = arith.constant 0 : i32
    return %c0_i32, %c0_i32_0 : i32, i32
  }
}

</mosaic_0001>

<llo_original>
// kernel: lightgcn_forward.2
$region0: #{lightgcn_forward.2}
  #allocation0 [shape = 'u32[]', space=smem, size = 0x4, offset = 0x4, fixed_abs, tag = 'smem constant byte address 0x4 - core index']
  #allocation1 [shape = 'u32[144,128]{1,0:T(1,128)}', space=vmem, size = 0x12000, scoped, tag = 'internal scratch']
  %s0 = inlined_call_operand.vmem [shape: bf16[256,256], index: 0, kind: input, shape index: {}]
  %s1 = inlined_call_operand.vmem [shape: bf16[256,128], index: 1, kind: input, shape index: {}]
  %s2 = inlined_call_operand.vmem [shape: bf16[256,128], index: 2, kind: input, shape index: {}]
  %s3 = inlined_call_operand.vmem [shape: f32[256,128], index: 3, kind: output, shape index: {0}]
  %s4 = inlined_call_operand.vmem [shape: f32[256,128], index: 4, kind: output, shape index: {1}]
  %5 = xla_tuple %s3, %s4
  %s6 = sld [smem:[#allocation0]]
  $region38: #{lightgcn_forward.2} parent=0
    _
  %s8 = ssub.s32 1, %s6
  %s9 = scalar_select 0, %s8, %s6
  // Predicated region
  $region2: #{lightgcn_forward.2} parent=0 // pred_check
    _
  $region3: #{lightgcn_forward.2} parent=0 // pred_check_branch
    %11 = sbr.rel (0) target = $region5
  $region4: #{lightgcn_forward.2} parent=0 // pred_region
    _
  $region5: #{lightgcn_forward.2} parent=0 // pred_fallthru
    _
  // Predicated region
  $region6: #{lightgcn_forward.2} parent=0 // pred_check
    _
  $region7: #{lightgcn_forward.2} parent=0 // pred_check_branch
    %13 = sbr.rel (0) target = $region9
  $region8: #{lightgcn_forward.2} parent=0 // pred_region
    _
  $region9: #{lightgcn_forward.2} parent=0 // pred_fallthru
    _
  // Predicated region
  $region10: #{lightgcn_forward.2} parent=0 // pred_check
    _
  $region11: #{lightgcn_forward.2} parent=0 // pred_check_branch
    %15 = sbr.rel (0) target = $region13
  $region12: #{lightgcn_forward.2} parent=0 // pred_region
    _
  $region13: #{lightgcn_forward.2} parent=0 // pred_fallthru
    _
  %p17 = scmp.eq.s32.totalorder 0, 0
  // Predicated region
  $region14: #{lightgcn_forward.2} parent=0 // pred_check
    %p18 = pneg %p17
  $region15: #{lightgcn_forward.2} parent=0 // pred_check_branch
    %20 = sbr.rel (%p18) target = $region17
  $region16: #{lightgcn_forward.2} parent=0 // pred_region
    %21 = vst [vmem:[%s3] sm:$0xff] 0.0
    %22 = vst [vmem:[%s3 + $0x8] sm:$0xff] 0.0
    %23 = vst [vmem:[%s3 + $0x10] sm:$0xff] 0.0
    %24 = vst [vmem:[%s3 + $0x18] sm:$0xff] 0.0
    %25 = vst [vmem:[%s3 + $0x20] sm:$0xff] 0.0
    %26 = vst [vmem:[%s3 + $0x28] sm:$0xff] 0.0
    %27 = vst [vmem:[%s3 + $0x30] sm:$0xff] 0.0
    %28 = vst [vmem:[%s3 + $0x38] sm:$0xff] 0.0
    %29 = vst [vmem:[%s3 + $0x40] sm:$0xff] 0.0
    %30 = vst [vmem:[%s3 + $0x48] sm:$0xff] 0.0
    %31 = vst [vmem:[%s3 + $0x50] sm:$0xff] 0.0
    %32 = vst [vmem:[%s3 + $0x58] sm:$0xff] 0.0
    %33 = vst [vmem:[%s3 + $0x60] sm:$0xff] 0.0
    %34 = vst [vmem:[%s3 + $0x68] sm:$0xff] 0.0
    %35 = vst [vmem:[%s3 + $0x70] sm:$0xff] 0.0
    %36 = vst [vmem:[%s3 + $0x78] sm:$0xff] 0.0
    %37 = vst [vmem:[%s3 + $0x80] sm:$0xff] 0.0
    %38 = vst [vmem:[%s3 + $0x88] sm:$0xff] 0.0
    %39 = vst [vmem:[%s3 + $0x90] sm:$0xff] 0.0
    %40 = vst [vmem:[%s3 + $0x98] sm:$0xff] 0.0
    %41 = vst [vmem:[%s3 + $0xa0] sm:$0xff] 0.0
    %42 = vst [vmem:[%s3 + $0xa8] sm:$0xff] 0.0
    %43 = vst [vmem:[%s3 + $0xb0] sm:$0xff] 0.0
    %44 = vst [vmem:[%s3 + $0xb8] sm:$0xff] 0.0
    %45 = vst [vmem:[%s3 + $0xc0] sm:$0xff] 0.0
    %46 = vst [vmem:[%s3 + $0xc8] sm:$0xff] 0.0
    %47 = vst [vmem:[%s3 + $0xd0] sm:$0xff] 0.0
    %48 = vst [vmem:[%s3 + $0xd8] sm:$0xff] 0.0
    %49 = vst [vmem:[%s3 + $0xe0] sm:$0xff] 0.0
    %50 = vst [vmem:[%s3 + $0xe8] sm:$0xff] 0.0
    %51 = vst [vmem:[%s3 + $0xf0] sm:$0xff] 0.0
    %52 = vst [vmem:[%s3 + $0xf8] sm:$0xff] 0.0
  $region17: #{lightgcn_forward.2} parent=0 // pred_fallthru
    _
  %p53 = scmp.eq.s32.totalorder 0, 0
  %p54 = pnand %p53, %p17
  %p55 = pneg %p54
  // Predicated region
  $region18: #{lightgcn_forward.2} parent=0 // pred_check
    _
  $region19: #{lightgcn_forward.2} parent=0 // pred_check_branch
    %57 = sbr.rel (%p54) target = $region21
  $region20: #{lightgcn_forward.2} parent=0 // pred_region
    %58 = vst [vmem:[%s4] sm:$0xff] 0.0
    %59 = vst [vmem:[%s4 + $0x8] sm:$0xff] 0.0
    %60 = vst [vmem:[%s4 + $0x10] sm:$0xff] 0.0
    %61 = vst [vmem:[%s4 + $0x18] sm:$0xff] 0.0
    %62 = vst [vmem:[%s4 + $0x20] sm:$0xff] 0.0
    %63 = vst [vmem:[%s4 + $0x28] sm:$0xff] 0.0
    %64 = vst [vmem:[%s4 + $0x30] sm:$0xff] 0.0
    %65 = vst [vmem:[%s4 + $0x38] sm:$0xff] 0.0
    %66 = vst [vmem:[%s4 + $0x40] sm:$0xff] 0.0
    %67 = vst [vmem:[%s4 + $0x48] sm:$0xff] 0.0
    %68 = vst [vmem:[%s4 + $0x50] sm:$0xff] 0.0
    %69 = vst [vmem:[%s4 + $0x58] sm:$0xff] 0.0
    %70 = vst [vmem:[%s4 + $0x60] sm:$0xff] 0.0
    %71 = vst [vmem:[%s4 + $0x68] sm:$0xff] 0.0
    %72 = vst [vmem:[%s4 + $0x70] sm:$0xff] 0.0
    %73 = vst [vmem:[%s4 + $0x78] sm:$0xff] 0.0
    %74 = vst [vmem:[%s4 + $0x80] sm:$0xff] 0.0
    %75 = vst [vmem:[%s4 + $0x88] sm:$0xff] 0.0
    %76 = vst [vmem:[%s4 + $0x90] sm:$0xff] 0.0
    %77 = vst [vmem:[%s4 + $0x98] sm:$0xff] 0.0
    %78 = vst [vmem:[%s4 + $0xa0] sm:$0xff] 0.0
    %79 = vst [vmem:[%s4 + $0xa8] sm:$0xff] 0.0
    %80 = vst [vmem:[%s4 + $0xb0] sm:$0xff] 0.0
    %81 = vst [vmem:[%s4 + $0xb8] sm:$0xff] 0.0
    %82 = vst [vmem:[%s4 + $0xc0] sm:$0xff] 0.0
    %83 = vst [vmem:[%s4 + $0xc8] sm:$0xff] 0.0
    %84 = vst [vmem:[%s4 + $0xd0] sm:$0xff] 0.0
    %85 = vst [vmem:[%s4 + $0xd8] sm:$0xff] 0.0
    %86 = vst [vmem:[%s4 + $0xe0] sm:$0xff] 0.0
    %87 = vst [vmem:[%s4 + $0xe8] sm:$0xff] 0.0
    %88 = vst [vmem:[%s4 + $0xf0] sm:$0xff] 0.0
    %89 = vst [vmem:[%s4 + $0xf8] sm:$0xff] 0.0
  $region21: #{lightgcn_forward.2} parent=0 // pred_fallthru
    _
  %v90 = vld [vmem:[%s0] sm:$0xff]
  %v91 = vld [vmem:[%s0 + $0x8] sm:$0xff]
  %v92 = vld [vmem:[%s0 + $0x10] sm:$0xff]
  %v93 = vld [vmem:[%s0 + $0x18] sm:$0xff]
  %v94 = vld [vmem:[%s0 + $0x20] sm:$0xff]
  %v95 = vld [vmem:[%s0 + $0x28] sm:$0xff]
  %v96 = vld [vmem:[%s0 + $0x30] sm:$0xff]
  %v97 = vld [vmem:[%s0 + $0x38] sm:$0xff]
  %v98 = vld [vmem:[%s0 + $0x40] sm:$0xff]
  %v99 = vld [vmem:[%s0 + $0x48] sm:$0xff]
  %v100 = vld [vmem:[%s0 + $0x50] sm:$0xff]
  %v101 = vld [vmem:[%s0 + $0x58] sm:$0xff]
  %v102 = vld [vmem:[%s0 + $0x60] sm:$0xff]
  %v103 = vld [vmem:[%s0 + $0x68] sm:$0xff]
  %v104 = vld [vmem:[%s0 + $0x70] sm:$0xff]
  %v105 = vld [vmem:[%s0 + $0x78] sm:$0xff]
  %v106 = vld [vmem:[%s0 + $0x80] sm:$0xff]
  %v107 = vld [vmem:[%s0 + $0x88] sm:$0xff]
  %v108 = vld [vmem:[%s0 + $0x90] sm:$0xff]
  %v109 = vld [vmem:[%s0 + $0x98] sm:$0xff]
  %v110 = vld [vmem:[%s0 + $0xa0] sm:$0xff]
  %v111 = vld [vmem:[%s0 + $0xa8] sm:$0xff]
  %v112 = vld [vmem:[%s0 + $0xb0] sm:$0xff]
  %v113 = vld [vmem:[%s0 + $0xb8] sm:$0xff]
  %v114 = vld [vmem:[%s0 + $0xc0] sm:$0xff]
  %v115 = vld [vmem:[%s0 + $0xc8] sm:$0xff]
  %v116 = vld [vmem:[%s0 + $0xd0] sm:$0xff]
  %v117 = vld [vmem:[%s0 + $0xd8] sm:$0xff]
  %v118 = vld [vmem:[%s0 + $0xe0] sm:$0xff]
  %v119 = vld [vmem:[%s0 + $0xe8] sm:$0xff]
  %v120 = vld [vmem:[%s0 + $0xf0] sm:$0xff]
  %v121 = vld [vmem:[%s0 + $0xf8] sm:$0xff]
  %s122 = smul.u32 0, 256
  %s123 = sshra.s32 %s122, 3
  %s124 = sand.u32 %s122, 7
  %s125 = smul.addr %s123, 4
  %s126 = scalar_lea.vmem %s2, %s125
  %v127 = vld [vmem:[%s126] sm:$0xf]
  %v128 = vld [vmem:[%s126 + $0x4] sm:$0xf]
  %v129 = vld [vmem:[%s126 + $0x8] sm:$0xf]
  %v130 = vld [vmem:[%s126 + $0xc] sm:$0xf]
  %v131 = vld [vmem:[%s126 + $0x10] sm:$0xf]
  %v132 = vld [vmem:[%s126 + $0x14] sm:$0xf]
  %v133 = vld [vmem:[%s126 + $0x18] sm:$0xf]
  %v134 = vld [vmem:[%s126 + $0x1c] sm:$0xf]
  %v135 = vld [vmem:[%s126 + $0x20] sm:$0xf]
  %v136 = vld [vmem:[%s126 + $0x24] sm:$0xf]
  %v137 = vld [vmem:[%s126 + $0x28] sm:$0xf]
  %v138 = vld [vmem:[%s126 + $0x2c] sm:$0xf]
  %v139 = vld [vmem:[%s126 + $0x30] sm:$0xf]
  %v140 = vld [vmem:[%s126 + $0x34] sm:$0xf]
  %v141 = vld [vmem:[%s126 + $0x38] sm:$0xf]
  %v142 = vld [vmem:[%s126 + $0x3c] sm:$0xf]
  %v143 = vld [vmem:[%s126 + $0x40] sm:$0xf]
  %v144 = vld [vmem:[%s126 + $0x44] sm:$0xf]
  %v145 = vld [vmem:[%s126 + $0x48] sm:$0xf]
  %v146 = vld [vmem:[%s126 + $0x4c] sm:$0xf]
  %v147 = vld [vmem:[%s126 + $0x50] sm:$0xf]
  %v148 = vld [vmem:[%s126 + $0x54] sm:$0xf]
  %v149 = vld [vmem:[%s126 + $0x58] sm:$0xf]
  %v150 = vld [vmem:[%s126 + $0x5c] sm:$0xf]
  %v151 = vld [vmem:[%s126 + $0x60] sm:$0xf]
  %v152 = vld [vmem:[%s126 + $0x64] sm:$0xf]
  %v153 = vld [vmem:[%s126 + $0x68] sm:$0xf]
  %v154 = vld [vmem:[%s126 + $0x6c] sm:$0xf]
  %v155 = vld [vmem:[%s126 + $0x70] sm:$0xf]
  %v156 = vld [vmem:[%s126 + $0x74] sm:$0xf]
  %v157 = vld [vmem:[%s126 + $0x78] sm:$0xf]
  %v158 = vld [vmem:[%s126 + $0x7c] sm:$0xf]
  %v159 = vld [vmem:[%s3] sm:$0xff]
  %v160 = vld [vmem:[%s3 + $0x8] sm:$0xff]
  %v161 = vld [vmem:[%s3 + $0x10] sm:$0xff]
  %v162 = vld [vmem:[%s3 + $0x18] sm:$0xff]
  %v163 = vld [vmem:[%s3 + $0x20] sm:$0xff]
  %v164 = vld [vmem:[%s3 + $0x28] sm:$0xff]
  %v165 = vld [vmem:[%s3 + $0x30] sm:$0xff]
  %v166 = vld [vmem:[%s3 + $0x38] sm:$0xff]
  %v167 = vld [vmem:[%s3 + $0x40] sm:$0xff]
  %v168 = vld [vmem:[%s3 + $0x48] sm:$0xff]
  %v169 = vld [vmem:[%s3 + $0x50] sm:$0xff]
  %v170 = vld [vmem:[%s3 + $0x58] sm:$0xff]
  %v171 = vld [vmem:[%s3 + $0x60] sm:$0xff]
  %v172 = vld [vmem:[%s3 + $0x68] sm:$0xff]
  %v173 = vld [vmem:[%s3 + $0x70] sm:$0xff]
  %v174 = vld [vmem:[%s3 + $0x78] sm:$0xff]
  %v175 = vld [vmem:[%s3 + $0x80] sm:$0xff]
  %v176 = vld [vmem:[%s3 + $0x88] sm:$0xff]
  %v177 = vld [vmem:[%s3 + $0x90] sm:$0xff]
  %v178 = vld [vmem:[%s3 + $0x98] sm:$0xff]
  %v179 = vld [vmem:[%s3 + $0xa0] sm:$0xff]
  %v180 = vld [vmem:[%s3 + $0xa8] sm:$0xff]
  %v181 = vld [vmem:[%s3 + $0xb0] sm:$0xff]
  %v182 = vld [vmem:[%s3 + $0xb8] sm:$0xff]
  %v183 = vld [vmem:[%s3 + $0xc0] sm:$0xff]
  %v184 = vld [vmem:[%s3 + $0xc8] sm:$0xff]
  %v185 = vld [vmem:[%s3 + $0xd0] sm:$0xff]
  %v186 = vld [vmem:[%s3 + $0xd8] sm:$0xff]
  %v187 = vld [vmem:[%s3 + $0xe0] sm:$0xff]
  %v188 = vld [vmem:[%s3 + $0xe8] sm:$0xff]
  %v189 = vld [vmem:[%s3 + $0xf0] sm:$0xff]
  %v190 = vld [vmem:[%s3 + $0xf8] sm:$0xff]
  %v223 = vunpack.c.l.b16 %v90
  %v224 = vunpack.c.h.b16 %v90
  %v225 = vunpack.c.l.b16 %v91
  %v226 = vunpack.c.h.b16 %v91
  %v227 = vunpack.c.l.b16 %v92
  %v228 = vunpack.c.h.b16 %v92
  %v229 = vunpack.c.l.b16 %v93
  %v230 = vunpack.c.h.b16 %v93
  %v231 = vunpack.c.l.b16 %v94
  %v232 = vunpack.c.h.b16 %v94
  %v233 = vunpack.c.l.b16 %v95
  %v234 = vunpack.c.h.b16 %v95
  %v235 = vunpack.c.l.b16 %v96
  %v236 = vunpack.c.h.b16 %v96
  %v237 = vunpack.c.l.b16 %v97
  %v238 = vunpack.c.h.b16 %v97
  %v239 = vunpack.c.l.b16 %v98
  %v240 = vunpack.c.h.b16 %v98
  %v241 = vunpack.c.l.b16 %v99
  %v242 = vunpack.c.h.b16 %v99
  %v243 = vunpack.c.l.b16 %v100
  %v244 = vunpack.c.h.b16 %v100
  %v245 = vunpack.c.l.b16 %v101
  %v246 = vunpack.c.h.b16 %v101
  %v247 = vunpack.c.l.b16 %v102
  %v248 = vunpack.c.h.b16 %v102
  %v249 = vunpack.c.l.b16 %v103
  %v250 = vunpack.c.h.b16 %v103
  %v251 = vunpack.c.l.b16 %v104
  %v252 = vunpack.c.h.b16 %v104
  %v253 = vunpack.c.l.b16 %v105
  %v254 = vunpack.c.h.b16 %v105
  %v255 = vunpack.c.l.b16 %v106
  %v256 = vunpack.c.h.b16 %v106
  %v257 = vunpack.c.l.b16 %v107
  %v258 = vunpack.c.h.b16 %v107
  %v259 = vunpack.c.l.b16 %v108
  %v260 = vunpack.c.h.b16 %v108
  %v261 = vunpack.c.l.b16 %v109
  %v262 = vunpack.c.h.b16 %v109
  %v263 = vunpack.c.l.b16 %v110
  %v264 = vunpack.c.h.b16 %v110
  %v265 = vunpack.c.l.b16 %v111
  %v266 = vunpack.c.h.b16 %v111
  %v267 = vunpack.c.l.b16 %v112
  %v268 = vunpack.c.h.b16 %v112
  %v269 = vunpack.c.l.b16 %v113
  %v270 = vunpack.c.h.b16 %v113
  %v271 = vunpack.c.l.b16 %v114
  %v272 = vunpack.c.h.b16 %v114
  %v273 = vunpack.c.l.b16 %v115
  %v274 = vunpack.c.h.b16 %v115
  %v275 = vunpack.c.l.b16 %v116
  %v276 = vunpack.c.h.b16 %v116
  %v277 = vunpack.c.l.b16 %v117
  %v278 = vunpack.c.h.b16 %v117
  %v279 = vunpack.c.l.b16 %v118
  %v280 = vunpack.c.h.b16 %v118
  %v281 = vunpack.c.l.b16 %v119
  %v282 = vunpack.c.h.b16 %v119
  %v283 = vunpack.c.l.b16 %v120
  %v284 = vunpack.c.h.b16 %v120
  %v285 = vunpack.c.l.b16 %v121
  %v286 = vunpack.c.h.b16 %v121
  %v287 = vpack.c.b16 %v225, %v223
  %v288 = vpack.c.b16 %v226, %v224
  %v289 = vpack.c.b16 %v229, %v227
  %v290 = vpack.c.b16 %v230, %v228
  %v291 = vpack.c.b16 %v233, %v231
  %v292 = vpack.c.b16 %v234, %v232
  %v293 = vpack.c.b16 %v237, %v235
  %v294 = vpack.c.b16 %v238, %v236
  %v295 = vpack.c.b16 %v241, %v239
  %v296 = vpack.c.b16 %v242, %v240
  %v297 = vpack.c.b16 %v245, %v243
  %v298 = vpack.c.b16 %v246, %v244
  %v299 = vpack.c.b16 %v249, %v247
  %v300 = vpack.c.b16 %v250, %v248
  %v301 = vpack.c.b16 %v253, %v251
  %v302 = vpack.c.b16 %v254, %v252
  %v303 = vpack.c.b16 %v257, %v255
  %v304 = vpack.c.b16 %v258, %v256
  %v305 = vpack.c.b16 %v261, %v259
  %v306 = vpack.c.b16 %v262, %v260
  %v307 = vpack.c.b16 %v265, %v263
  %v308 = vpack.c.b16 %v266, %v264
  %v309 = vpack.c.b16 %v269, %v267
  %v310 = vpack.c.b16 %v270, %v268
  %v311 = vpack.c.b16 %v273, %v271
  %v312 = vpack.c.b16 %v274, %v272
  %v313 = vpack.c.b16 %v277, %v275
  %v314 = vpack.c.b16 %v278, %v276
  %v315 = vpack.c.b16 %v281, %v279
  %v316 = vpack.c.b16 %v282, %v280
  %v317 = vpack.c.b16 %v285, %v283
  %v318 = vpack.c.b16 %v286, %v284
  %v383 = vunpack.c.l.b16 %v127
  %v384 = vunpack.c.l.b16 %v128
  %v385 = vunpack.c.l.b16 %v129
  %v386 = vunpack.c.l.b16 %v130
  %v387 = vunpack.c.l.b16 %v131
  %v388 = vunpack.c.l.b16 %v132
  %v389 = vunpack.c.l.b16 %v133
  %v390 = vunpack.c.l.b16 %v134
  %v391 = vunpack.c.l.b16 %v135
  %v392 = vunpack.c.l.b16 %v136
  %v393 = vunpack.c.l.b16 %v137
  %v394 = vunpack.c.l.b16 %v138
  %v395 = vunpack.c.l.b16 %v139
  %v396 = vunpack.c.l.b16 %v140
  %v397 = vunpack.c.l.b16 %v141
  %v398 = vunpack.c.l.b16 %v142
  %v399 = vunpack.c.l.b16 %v143
  %v400 = vunpack.c.l.b16 %v144
  %v401 = vunpack.c.l.b16 %v145
  %v402 = vunpack.c.l.b16 %v146
  %v403 = vunpack.c.l.b16 %v147
  %v404 = vunpack.c.l.b16 %v148
  %v405 = vunpack.c.l.b16 %v149
  %v406 = vunpack.c.l.b16 %v150
  %v407 = vunpack.c.l.b16 %v151
  %v408 = vunpack.c.l.b16 %v152
  %v409 = vunpack.c.l.b16 %v153
  %v410 = vunpack.c.l.b16 %v154
  %v411 = vunpack.c.l.b16 %v155
  %v412 = vunpack.c.l.b16 %v156
  %v413 = vunpack.c.l.b16 %v157
  %v414 = vunpack.c.l.b16 %v158
  %v415 = vpack.c.b16 %v384, %v383
  %v416 = vpack.c.b16 %v386, %v385
  %v417 = vpack.c.b16 %v388, %v387
  %v418 = vpack.c.b16 %v390, %v389
  %v419 = vpack.c.b16 %v392, %v391
  %v420 = vpack.c.b16 %v394, %v393
  %v421 = vpack.c.b16 %v396, %v395
  %v422 = vpack.c.b16 %v398, %v397
  %v423 = vpack.c.b16 %v400, %v399
  %v424 = vpack.c.b16 %v402, %v401
  %v425 = vpack.c.b16 %v404, %v403
  %v426 = vpack.c.b16 %v406, %v405
  %v427 = vpack.c.b16 %v408, %v407
  %v428 = vpack.c.b16 %v410, %v409
  %v429 = vpack.c.b16 %v412, %v411
  %v430 = vpack.c.b16 %v414, %v413
  %447 = vmatprep.subr.bf16.mxu0 0
  %448 = vmatpush1.bf16.msra.mxu0 %v415
  %449 = vmatprep.subr.bf16.mxu0 0
  %450 = vmatpush1.bf16.msra.mxu0 %v416
  %451 = vmatprep.subr.bf16.mxu0 0
  %452 = vmatpush1.bf16.msra.mxu0 %v417
  %453 = vmatprep.subr.bf16.mxu0 0
  %454 = vmatpush1.bf16.msra.mxu0 %v418
  %455 = vmatprep.subr.bf16.mxu0 0
  %456 = vmatpush1.bf16.msra.mxu0 %v419
  %457 = vmatprep.subr.bf16.mxu0 0
  %458 = vmatpush1.bf16.msra.mxu0 %v420
  %459 = vmatprep.subr.bf16.mxu0 0
  %460 = vmatpush1.bf16.msra.mxu0 %v421
  %461 = vmatprep.subr.bf16.mxu0 0
  %462 = vmatpush1.bf16.msra.mxu0 %v422
  %463 = vmatprep.subr.bf16.mxu0 0
  %464 = vmatpush1.bf16.msra.mxu0 %v423
  %465 = vmatprep.subr.bf16.mxu0 0
  %466 = vmatpush1.bf16.msra.mxu0 %v424
  %467 = vmatprep.subr.bf16.mxu0 0
  %468 = vmatpush1.bf16.msra.mxu0 %v425
  %469 = vmatprep.subr.bf16.mxu0 0
  %470 = vmatpush1.bf16.msra.mxu0 %v426
  %471 = vmatprep.subr.bf16.mxu0 0
  %472 = vmatpush1.bf16.msra.mxu0 %v427
  %473 = vmatprep.subr.bf16.mxu0 0
  %474 = vmatpush1.bf16.msra.mxu0 %v428
  %475 = vmatprep.subr.bf16.mxu0 0
  %476 = vmatpush1.bf16.msra.mxu0 %v429
  %477 = vmatprep.subr.bf16.mxu0 0
  %478 = vmatpush1.bf16.msra.mxu0 %v430
  %479 = vmatprep.mubr.bf16.mxu0 %v288
  %480 = vmatmul.mubr.bf16.gmra.mrb[0].mxu0 %v287
  %v481 = vpop.f32.mrb[0].mxu0
  %v482 = vadd.f32 0.0, %v481
  %v483 = vpop.f32.mrb[0].mxu0
  %v484 = vpop.f32.mrb[0].mxu0
  %v485 = vadd.f32 0.0, %v484
  %v486 = vpop.f32.mrb[0].mxu0
  %487 = vmatprep.mubr.bf16.mxu0 %v290
  %488 = vmatmul.mubr.bf16.gmra.mrb[0].mxu0 %v289
  %v489 = vpop.f32.mrb[0].mxu0
  %v490 = vadd.f32 0.0, %v489
  %v491 = vpop.f32.mrb[0].mxu0
  %v492 = vpop.f32.mrb[0].mxu0
  %v493 = vadd.f32 0.0, %v492
  %v494 = vpop.f32.mrb[0].mxu0
  %495 = vmatprep.mubr.bf16.mxu0 %v292
  %496 = vmatmul.mubr.bf16.gmra.mrb[0].mxu0 %v291
  %v497 = vpop.f32.mrb[0].mxu0
  %v498 = vadd.f32 0.0, %v497
  %v499 = vpop.f32.mrb[0].mxu0
  %v500 = vpop.f32.mrb[0].mxu0
  %v501 = vadd.f32 0.0, %v500
  %v502 = vpop.f32.mrb[0].mxu0
  %503 = vmatprep.mubr.bf16.mxu0 %v294
  %504 = vmatmul.mubr.bf16.gmra.mrb[0].mxu0 %v293
  %v505 = vpop.f32.mrb[0].mxu0
  %v506 = vadd.f32 0.0, %v505
  %v507 = vpop.f32.mrb[0].mxu0
  %v508 = vpop.f32.mrb[0].mxu0
  %v509 = vadd.f32 0.0, %v508
  %v510 = vpop.f32.mrb[0].mxu0
  %511 = vmatprep.mubr.bf16.mxu0 %v296
  %512 = vmatmul.mubr.bf16.gmra.mrb[0].mxu0 %v295
  %v513 = vpop.f32.mrb[0].mxu0
  %v514 = vadd.f32 0.0, %v513
  %v515 = vpop.f32.mrb[0].mxu0
  %v516 = vpop.f32.mrb[0].mxu0
  %v517 = vadd.f32 0.0, %v516
  %v518 = vpop.f32.mrb[0].mxu0
  %519 = vmatprep.mubr.bf16.mxu0 %v298
  %520 = vmatmul.mubr.bf16.gmra.mrb[0].mxu0 %v297
  %v521 = vpop.f32.mrb[0].mxu0
  %v522 = vadd.f32 0.0, %v521
  %v523 = vpop.f32.mrb[0].mxu0
  %v524 = vpop.f32.mrb[0].mxu0
  %v525 = vadd.f32 0.0, %v524
  %v526 = vpop.f32.mrb[0].mxu0
  %527 = vmatprep.mubr.bf16.mxu0 %v300
  %528 = vmatmul.mubr.bf16.gmra.mrb[0].mxu0 %v299
  %v529 = vpop.f32.mrb[0].mxu0
  %v530 = vadd.f32 0.0, %v529
  %v531 = vpop.f32.mrb[0].mxu0
  %v532 = vpop.f32.mrb[0].mxu0
  %v533 = vadd.f32 0.0, %v532
  %v534 = vpop.f32.mrb[0].mxu0
  %535 = vmatprep.mubr.bf16.mxu0 %v302
  %536 = vmatmul.mubr.bf16.gmra.mrb[0].mxu0 %v301
  %v537 = vpop.f32.mrb[0].mxu0
  %v538 = vadd.f32 0.0, %v537
  %v539 = vpop.f32.mrb[0].mxu0
  %v540 = vpop.f32.mrb[0].mxu0
  %v541 = vadd.f32 0.0, %v540
  %v542 = vpop.f32.mrb[0].mxu0
  %543 = vmatprep.mubr.bf16.mxu0 %v304
  %544 = vmatmul.mubr.bf16.gmra.mrb[0].mxu0 %v303
  %v545 = vpop.f32.mrb[0].mxu0
  %v546 = vadd.f32 0.0, %v545
  %v547 = vpop.f32.mrb[0].mxu0
  %v548 = vpop.f32.mrb[0].mxu0
  %v549 = vadd.f32 0.0, %v548
  %v550 = vpop.f32.mrb[0].mxu0
  %551 = vmatprep.mubr.bf16.mxu0 %v306
  %552 = vmatmul.mubr.bf16.gmra.mrb[0].mxu0 %v305
  %v553 = vpop.f32.mrb[0].mxu0
  %v554 = vadd.f32 0.0, %v553
  %v555 = vpop.f32.mrb[0].mxu0
  %v556 = vpop.f32.mrb[0].mxu0
  %v557 = vadd.f32 0.0, %v556
  %v558 = vpop.f32.mrb[0].mxu0
  %559 = vmatprep.mubr.bf16.mxu0 %v308
  %560 = vmatmul.mubr.bf16.gmra.mrb[0].mxu0 %v307
  %v561 = vpop.f32.mrb[0].mxu0
  %v562 = vadd.f32 0.0, %v561
  %v563 = vpop.f32.mrb[0].mxu0
  %v564 = vpop.f32.mrb[0].mxu0
  %v565 = vadd.f32 0.0, %v564
  %v566 = vpop.f32.mrb[0].mxu0
  %567 = vmatprep.mubr.bf16.mxu0 %v310
  %568 = vmatmul.mubr.bf16.gmra.mrb[0].mxu0 %v309
  %v569 = vpop.f32.mrb[0].mxu0
  %v570 = vadd.f32 0.0, %v569
  %v571 = vpop.f32.mrb[0].mxu0
  %v572 = vpop.f32.mrb[0].mxu0
  %v573 = vadd.f32 0.0, %v572
  %v574 = vpop.f32.mrb[0].mxu0
  %575 = vmatprep.mubr.bf16.mxu0 %v312
  %576 = vmatmul.mubr.bf16.gmra.mrb[0].mxu0 %v311
  %v577 = vpop.f32.mrb[0].mxu0
  %v578 = vadd.f32 0.0, %v577
  %v579 = vpop.f32.mrb[0].mxu0
  %v580 = vpop.f32.mrb[0].mxu0
  %v581 = vadd.f32 0.0, %v580
  %v582 = vpop.f32.mrb[0].mxu0
  %583 = vmatprep.mubr.bf16.mxu0 %v314
  %584 = vmatmul.mubr.bf16.gmra.mrb[0].mxu0 %v313
  %v585 = vpop.f32.mrb[0].mxu0
  %v586 = vadd.f32 0.0, %v585
  %v587 = vpop.f32.mrb[0].mxu0
  %v588 = vpop.f32.mrb[0].mxu0
  %v589 = vadd.f32 0.0, %v588
  %v590 = vpop.f32.mrb[0].mxu0
  %591 = vmatprep.mubr.bf16.mxu0 %v316
  %592 = vmatmul.mubr.bf16.gmra.mrb[0].mxu0 %v315
  %v593 = vpop.f32.mrb[0].mxu0
  %v594 = vadd.f32 0.0, %v593
  %v595 = vpop.f32.mrb[0].mxu0
  %v596 = vpop.f32.mrb[0].mxu0
  %v597 = vadd.f32 0.0, %v596
  %v598 = vpop.f32.mrb[0].mxu0
  %599 = vmatprep.mubr.bf16.mxu0 %v318
  %600 = vmatmul.mubr.bf16.gmra.mrb[0].mxu0 %v317
  %v601 = vpop.f32.mrb[0].mxu0
  %v602 = vadd.f32 0.0, %v601
  %v603 = vpop.f32.mrb[0].mxu0
  %v604 = vpop.f32.mrb[0].mxu0
  %v605 = vadd.f32 0.0, %v604
  %v606 = vpop.f32.mrb[0].mxu0
  %607 = vdwg.mxu0
  %v608 = vadd.f32 %v159, %v482
  %v609 = vadd.f32 %v160, %v485
  %v610 = vadd.f32 %v161, %v490
  %v611 = vadd.f32 %v162, %v493
  %v612 = vadd.f32 %v163, %v498
  %v613 = vadd.f32 %v164, %v501
  %v614 = vadd.f32 %v165, %v506
  %v615 = vadd.f32 %v166, %v509
  %v616 = vadd.f32 %v167, %v514
  %v617 = vadd.f32 %v168, %v517
  %v618 = vadd.f32 %v169, %v522
  %v619 = vadd.f32 %v170, %v525
  %v620 = vadd.f32 %v171, %v530
  %v621 = vadd.f32 %v172, %v533
  %v622 = vadd.f32 %v173, %v538
  %v623 = vadd.f32 %v174, %v541
  %v624 = vadd.f32 %v175, %v546
  %v625 = vadd.f32 %v176, %v549
  %v626 = vadd.f32 %v177, %v554
  %v627 = vadd.f32 %v178, %v557
  %v628 = vadd.f32 %v179, %v562
  %v629 = vadd.f32 %v180, %v565
  %v630 = vadd.f32 %v181, %v570
  %v631 = vadd.f32 %v182, %v573
  %v632 = vadd.f32 %v183, %v578
  %v633 = vadd.f32 %v184, %v581
  %v634 = vadd.f32 %v185, %v586
  %v635 = vadd.f32 %v186, %v589
  %v636 = vadd.f32 %v187, %v594
  %v637 = vadd.f32 %v188, %v597
  %v638 = vadd.f32 %v189, %v602
  %v639 = vadd.f32 %v190, %v605
  %640 = vst [vmem:[%s3] sm:$0xff] %v608
  %641 = vst [vmem:[%s3 + $0x8] sm:$0xff] %v609
  %642 = vst [vmem:[%s3 + $0x10] sm:$0xff] %v610
  %643 = vst [vmem:[%s3 + $0x18] sm:$0xff] %v611
  %644 = vst [vmem:[%s3 + $0x20] sm:$0xff] %v612
  %645 = vst [vmem:[%s3 + $0x28] sm:$0xff] %v613
  %646 = vst [vmem:[%s3 + $0x30] sm:$0xff] %v614
  %647 = vst [vmem:[%s3 + $0x38] sm:$0xff] %v615
  %648 = vst [vmem:[%s3 + $0x40] sm:$0xff] %v616
  %649 = vst [vmem:[%s3 + $0x48] sm:$0xff] %v617
  %650 = vst [vmem:[%s3 + $0x50] sm:$0xff] %v618
  %651 = vst [vmem:[%s3 + $0x58] sm:$0xff] %v619
  %652 = vst [vmem:[%s3 + $0x60] sm:$0xff] %v620
  %653 = vst [vmem:[%s3 + $0x68] sm:$0xff] %v621
  %654 = vst [vmem:[%s3 + $0x70] sm:$0xff] %v622
  %655 = vst [vmem:[%s3 + $0x78] sm:$0xff] %v623
  %656 = vst [vmem:[%s3 + $0x80] sm:$0xff] %v624
  %657 = vst [vmem:[%s3 + $0x88] sm:$0xff] %v625
  %658 = vst [vmem:[%s3 + $0x90] sm:$0xff] %v626
  %659 = vst [vmem:[%s3 + $0x98] sm:$0xff] %v627
  %660 = vst [vmem:[%s3 + $0xa0] sm:$0xff] %v628
  %661 = vst [vmem:[%s3 + $0xa8] sm:$0xff] %v629
  %662 = vst [vmem:[%s3 + $0xb0] sm:$0xff] %v630
  %663 = vst [vmem:[%s3 + $0xb8] sm:$0xff] %v631
  %664 = vst [vmem:[%s3 + $0xc0] sm:$0xff] %v632
  %665 = vst [vmem:[%s3 + $0xc8] sm:$0xff] %v633
  %666 = vst [vmem:[%s3 + $0xd0] sm:$0xff] %v634
  %667 = vst [vmem:[%s3 + $0xd8] sm:$0xff] %v635
  %668 = vst [vmem:[%s3 + $0xe0] sm:$0xff] %v636
  %669 = vst [vmem:[%s3 + $0xe8] sm:$0xff] %v637
  %670 = vst [vmem:[%s3 + $0xf0] sm:$0xff] %v638
  %671 = vst [vmem:[%s3 + $0xf8] sm:$0xff] %v639
  %s672 = scalar_lea.vmem %s4, %s122
  %v673 = vld [vmem:[%s672] sm:$0xff]
  %v674 = vld [vmem:[%s672 + $0x8] sm:$0xff]
  %v675 = vld [vmem:[%s672 + $0x10] sm:$0xff]
  %v676 = vld [vmem:[%s672 + $0x18] sm:$0xff]
  %v677 = vld [vmem:[%s672 + $0x20] sm:$0xff]
  %v678 = vld [vmem:[%s672 + $0x28] sm:$0xff]
  %v679 = vld [vmem:[%s672 + $0x30] sm:$0xff]
  %v680 = vld [vmem:[%s672 + $0x38] sm:$0xff]
  %v681 = vld [vmem:[%s672 + $0x40] sm:$0xff]
  %v682 = vld [vmem:[%s672 + $0x48] sm:$0xff]
  %v683 = vld [vmem:[%s672 + $0x50] sm:$0xff]
  %v684 = vld [vmem:[%s672 + $0x58] sm:$0xff]
  %v685 = vld [vmem:[%s672 + $0x60] sm:$0xff]
  %v686 = vld [vmem:[%s672 + $0x68] sm:$0xff]
  %v687 = vld [vmem:[%s672 + $0x70] sm:$0xff]
  %v688 = vld [vmem:[%s672 + $0x78] sm:$0xff]
  %v689 = vld [vmem:[%s672 + $0x80] sm:$0xff]
  %v690 = vld [vmem:[%s672 + $0x88] sm:$0xff]
  %v691 = vld [vmem:[%s672 + $0x90] sm:$0xff]
  %v692 = vld [vmem:[%s672 + $0x98] sm:$0xff]
  %v693 = vld [vmem:[%s672 + $0xa0] sm:$0xff]
  %v694 = vld [vmem:[%s672 + $0xa8] sm:$0xff]
  %v695 = vld [vmem:[%s672 + $0xb0] sm:$0xff]
  %v696 = vld [vmem:[%s672 + $0xb8] sm:$0xff]
  %v697 = vld [vmem:[%s672 + $0xc0] sm:$0xff]
  %v698 = vld [vmem:[%s672 + $0xc8] sm:$0xff]
  %v699 = vld [vmem:[%s672 + $0xd0] sm:$0xff]
  %v700 = vld [vmem:[%s672 + $0xd8] sm:$0xff]
  %v701 = vld [vmem:[%s672 + $0xe0] sm:$0xff]
  %v702 = vld [vmem:[%s672 + $0xe8] sm:$0xff]
  %v703 = vld [vmem:[%s672 + $0xf0] sm:$0xff]
  %v704 = vld [vmem:[%s672 + $0xf8] sm:$0xff]
  %v705 = vld [vmem:[%s1] sm:$0xf]
  %v706 = vld [vmem:[%s1 + $0x4] sm:$0xf]
  %v707 = vld [vmem:[%s1 + $0x8] sm:$0xf]
  %v708 = vld [vmem:[%s1 + $0xc] sm:$0xf]
  %v709 = vld [vmem:[%s1 + $0x10] sm:$0xf]
  %v710 = vld [vmem:[%s1 + $0x14] sm:$0xf]
  %v711 = vld [vmem:[%s1 + $0x18] sm:$0xf]
  %v712 = vld [vmem:[%s1 + $0x1c] sm:$0xf]
  %v713 = vld [vmem:[%s1 + $0x20] sm:$0xf]
  %v714 = vld [vmem:[%s1 + $0x24] sm:$0xf]
  %v715 = vld [vmem:[%s1 + $0x28] sm:$0xf]
  %v716 = vld [vmem:[%s1 + $0x2c] sm:$0xf]
  %v717 = vld [vmem:[%s1 + $0x30] sm:$0xf]
  %v718 = vld [vmem:[%s1 + $0x34] sm:$0xf]
  %v719 = vld [vmem:[%s1 + $0x38] sm:$0xf]
  %v720 = vld [vmem:[%s1 + $0x3c] sm:$0xf]
  %v721 = vld [vmem:[%s1 + $0x40] sm:$0xf]
  %v722 = vld [vmem:[%s1 + $0x44] sm:$0xf]
  %v723 = vld [vmem:[%s1 + $0x48] sm:$0xf]
  %v724 = vld [vmem:[%s1 + $0x4c] sm:$0xf]
  %v725 = vld [vmem:[%s1 + $0x50] sm:$0xf]
  %v726 = vld [vmem:[%s1 + $0x54] sm:$0xf]
  %v727 = vld [vmem:[%s1 + $0x58] sm:$0xf]
  %v728 = vld [vmem:[%s1 + $0x5c] sm:$0xf]
  %v729 = vld [vmem:[%s1 + $0x60] sm:$0xf]
  %v730 = vld [vmem:[%s1 + $0x64] sm:$0xf]
  %v731 = vld [vmem:[%s1 + $0x68] sm:$0xf]
  %v732 = vld [vmem:[%s1 + $0x6c] sm:$0xf]
  %v733 = vld [vmem:[%s1 + $0x70] sm:$0xf]
  %v734 = vld [vmem:[%s1 + $0x74] sm:$0xf]
  %v735 = vld [vmem:[%s1 + $0x78] sm:$0xf]
  %v736 = vld [vmem:[%s1 + $0x7c] sm:$0xf]
  %737 = vxpose.xlu0.c.b16.start [1/8] %v287, 128
  %738 = vxpose.xlu0.c.b16.cont [2/8] %v289, 128
  %739 = vxpose.xlu0.c.b16.cont [3/8] %v291, 128
  %740 = vxpose.xlu0.c.b16.cont [4/8] %v293, 128
  %741 = vxpose.xlu0.c.b16.cont [5/8] %v295, 128
  %742 = vxpose.xlu0.c.b16.cont [6/8] %v297, 128
  %743 = vxpose.xlu0.c.b16.cont [7/8] %v299, 128
  %744 = vxpose.xlu0.c.b16.end [8/8] %v301, 128
  %v745 = vpop.trf.xlu0
  %v746 = vpop.trf.xlu0
  %v747 = vpop.trf.xlu0
  %v748 = vpop.trf.xlu0
  %v749 = vpop.trf.xlu0
  %v750 = vpop.trf.xlu0
  %v751 = vpop.trf.xlu0
  %v752 = vpop.trf.xlu0
  %753 = vxpose.xlu0.c.b16.start [1/8] %v288, 128
  %754 = vxpose.xlu0.c.b16.cont [2/8] %v290, 128
  %755 = vxpose.xlu0.c.b16.cont [3/8] %v292, 128
  %756 = vxpose.xlu0.c.b16.cont [4/8] %v294, 128
  %757 = vxpose.xlu0.c.b16.cont [5/8] %v296, 128
  %758 = vxpose.xlu0.c.b16.cont [6/8] %v298, 128
  %759 = vxpose.xlu0.c.b16.cont [7/8] %v300, 128
  %760 = vxpose.xlu0.c.b16.end [8/8] %v302, 128
  %v761 = vpop.trf.xlu0
  %v762 = vpop.trf.xlu0
  %v763 = vpop.trf.xlu0
  %v764 = vpop.trf.xlu0
  %v765 = vpop.trf.xlu0
  %v766 = vpop.trf.xlu0
  %v767 = vpop.trf.xlu0
  %v768 = vpop.trf.xlu0
  %769 = vxpose.xlu0.c.b16.start [1/8] %v303, 128
  %770 = vxpose.xlu0.c.b16.cont [2/8] %v305, 128
  %771 = vxpose.xlu0.c.b16.cont [3/8] %v307, 128
  %772 = vxpose.xlu0.c.b16.cont [4/8] %v309, 128
  %773 = vxpose.xlu0.c.b16.cont [5/8] %v311, 128
  %774 = vxpose.xlu0.c.b16.cont [6/8] %v313, 128
  %775 = vxpose.xlu0.c.b16.cont [7/8] %v315, 128
  %776 = vxpose.xlu0.c.b16.end [8/8] %v317, 128
  %v777 = vpop.trf.xlu0
  %v778 = vpop.trf.xlu0
  %v779 = vpop.trf.xlu0
  %v780 = vpop.trf.xlu0
  %v781 = vpop.trf.xlu0
  %v782 = vpop.trf.xlu0
  %v783 = vpop.trf.xlu0
  %v784 = vpop.trf.xlu0
  %785 = vxpose.xlu0.c.b16.start [1/8] %v304, 128
  %786 = vxpose.xlu0.c.b16.cont [2/8] %v306, 128
  %787 = vxpose.xlu0.c.b16.cont [3/8] %v308, 128
  %788 = vxpose.xlu0.c.b16.cont [4/8] %v310, 128
  %789 = vxpose.xlu0.c.b16.cont [5/8] %v312, 128
  %790 = vxpose.xlu0.c.b16.cont [6/8] %v314, 128
  %791 = vxpose.xlu0.c.b16.cont [7/8] %v316, 128
  %792 = vxpose.xlu0.c.b16.end [8/8] %v318, 128
  %v793 = vpop.trf.xlu0
  %v794 = vpop.trf.xlu0
  %v795 = vpop.trf.xlu0
  %v796 = vpop.trf.xlu0
  %v797 = vpop.trf.xlu0
  %v798 = vpop.trf.xlu0
  %v799 = vpop.trf.xlu0
  %v800 = vpop.trf.xlu0
  %v833 = vunpack.c.l.b16 %v705
  %v834 = vunpack.c.l.b16 %v706
  %v835 = vunpack.c.l.b16 %v707
  %v836 = vunpack.c.l.b16 %v708
  %v837 = vunpack.c.l.b16 %v709
  %v838 = vunpack.c.l.b16 %v710
  %v839 = vunpack.c.l.b16 %v711
  %v840 = vunpack.c.l.b16 %v712
  %v841 = vunpack.c.l.b16 %v713
  %v842 = vunpack.c.l.b16 %v714
  %v843 = vunpack.c.l.b16 %v715
  %v844 = vunpack.c.l.b16 %v716
  %v845 = vunpack.c.l.b16 %v717
  %v846 = vunpack.c.l.b16 %v718
  %v847 = vunpack.c.l.b16 %v719
  %v848 = vunpack.c.l.b16 %v720
  %v849 = vunpack.c.l.b16 %v721
  %v850 = vunpack.c.l.b16 %v722
  %v851 = vunpack.c.l.b16 %v723
  %v852 = vunpack.c.l.b16 %v724
  %v853 = vunpack.c.l.b16 %v725
  %v854 = vunpack.c.l.b16 %v726
  %v855 = vunpack.c.l.b16 %v727
  %v856 = vunpack.c.l.b16 %v728
  %v857 = vunpack.c.l.b16 %v729
  %v858 = vunpack.c.l.b16 %v730
  %v859 = vunpack.c.l.b16 %v731
  %v860 = vunpack.c.l.b16 %v732
  %v861 = vunpack.c.l.b16 %v733
  %v862 = vunpack.c.l.b16 %v734
  %v863 = vunpack.c.l.b16 %v735
  %v864 = vunpack.c.l.b16 %v736
  %v865 = vpack.c.b16 %v834, %v833
  %v866 = vpack.c.b16 %v836, %v835
  %v867 = vpack.c.b16 %v838, %v837
  %v868 = vpack.c.b16 %v840, %v839
  %v869 = vpack.c.b16 %v842, %v841
  %v870 = vpack.c.b16 %v844, %v843
  %v871 = vpack.c.b16 %v846, %v845
  %v872 = vpack.c.b16 %v848, %v847
  %v873 = vpack.c.b16 %v850, %v849
  %v874 = vpack.c.b16 %v852, %v851
  %v875 = vpack.c.b16 %v854, %v853
  %v876 = vpack.c.b16 %v856, %v855
  %v877 = vpack.c.b16 %v858, %v857
  %v878 = vpack.c.b16 %v860, %v859
  %v879 = vpack.c.b16 %v862, %v861
  %v880 = vpack.c.b16 %v864, %v863
  %897 = vmatprep.subr.bf16.mxu0 0
  %898 = vmatpush1.bf16.msra.mxu0 %v865
  %899 = vmatprep.subr.bf16.mxu0 0
  %900 = vmatpush1.bf16.msra.mxu0 %v866
  %901 = vmatprep.subr.bf16.mxu0 0
  %902 = vmatpush1.bf16.msra.mxu0 %v867
  %903 = vmatprep.subr.bf16.mxu0 0
  %904 = vmatpush1.bf16.msra.mxu0 %v868
  %905 = vmatprep.subr.bf16.mxu0 0
  %906 = vmatpush1.bf16.msra.mxu0 %v869
  %907 = vmatprep.subr.bf16.mxu0 0
  %908 = vmatpush1.bf16.msra.mxu0 %v870
  %909 = vmatprep.subr.bf16.mxu0 0
  %910 = vmatpush1.bf16.msra.mxu0 %v871
  %911 = vmatprep.subr.bf16.mxu0 0
  %912 = vmatpush1.bf16.msra.mxu0 %v872
  %913 = vmatprep.subr.bf16.mxu0 0
  %914 = vmatpush1.bf16.msra.mxu0 %v873
  %915 = vmatprep.subr.bf16.mxu0 0
  %916 = vmatpush1.bf16.msra.mxu0 %v874
  %917 = vmatprep.subr.bf16.mxu0 0
  %918 = vmatpush1.bf16.msra.mxu0 %v875
  %919 = vmatprep.subr.bf16.mxu0 0
  %920 = vmatpush1.bf16.msra.mxu0 %v876
  %921 = vmatprep.subr.bf16.mxu0 0
  %922 = vmatpush1.bf16.msra.mxu0 %v877
  %923 = vmatprep.subr.bf16.mxu0 0
  %924 = vmatpush1.bf16.msra.mxu0 %v878
  %925 = vmatprep.subr.bf16.mxu0 0
  %926 = vmatpush1.bf16.msra.mxu0 %v879
  %927 = vmatprep.subr.bf16.mxu0 0
  %928 = vmatpush1.bf16.msra.mxu0 %v880
  %929 = vmatprep.mubr.bf16.mxu0 %v777
  %930 = vmatmul.mubr.bf16.gmra.mrb[0].mxu0 %v745
  %v931 = vpop.f32.mrb[0].mxu0
  %v932 = vadd.f32 0.0, %v931
  %v933 = vpop.f32.mrb[0].mxu0
  %v934 = vpop.f32.mrb[0].mxu0
  %v935 = vadd.f32 0.0, %v934
  %v936 = vpop.f32.mrb[0].mxu0
  %937 = vmatprep.mubr.bf16.mxu0 %v778
  %938 = vmatmul.mubr.bf16.gmra.mrb[0].mxu0 %v746
  %v939 = vpop.f32.mrb[0].mxu0
  %v940 = vadd.f32 0.0, %v939
  %v941 = vpop.f32.mrb[0].mxu0
  %v942 = vpop.f32.mrb[0].mxu0
  %v943 = vadd.f32 0.0, %v942
  %v944 = vpop.f32.mrb[0].mxu0
  %945 = vmatprep.mubr.bf16.mxu0 %v779
  %946 = vmatmul.mubr.bf16.gmra.mrb[0].mxu0 %v747
  %v947 = vpop.f32.mrb[0].mxu0
  %v948 = vadd.f32 0.0, %v947
  %v949 = vpop.f32.mrb[0].mxu0
  %v950 = vpop.f32.mrb[0].mxu0
  %v951 = vadd.f32 0.0, %v950
  %v952 = vpop.f32.mrb[0].mxu0
  %953 = vmatprep.mubr.bf16.mxu0 %v780
  %954 = vmatmul.mubr.bf16.gmra.mrb[0].mxu0 %v748
  %v955 = vpop.f32.mrb[0].mxu0
  %v956 = vadd.f32 0.0, %v955
  %v957 = vpop.f32.mrb[0].mxu0
  %v958 = vpop.f32.mrb[0].mxu0
  %v959 = vadd.f32 0.0, %v958
  %v960 = vpop.f32.mrb[0].mxu0
  %961 = vmatprep.mubr.bf16.mxu0 %v781
  %962 = vmatmul.mubr.bf16.gmra.mrb[0].mxu0 %v749
  %v963 = vpop.f32.mrb[0].mxu0
  %v964 = vadd.f32 0.0, %v963
  %v965 = vpop.f32.mrb[0].mxu0
  %v966 = vpop.f32.mrb[0].mxu0
  %v967 = vadd.f32 0.0, %v966
  %v968 = vpop.f32.mrb[0].mxu0
  %969 = vmatprep.mubr.bf16.mxu0 %v782
  %970 = vmatmul.mubr.bf16.gmra.mrb[0].mxu0 %v750
  %v971 = vpop.f32.mrb[0].mxu0
  %v972 = vadd.f32 0.0, %v971
  %v973 = vpop.f32.mrb[0].mxu0
  %v974 = vpop.f32.mrb[0].mxu0
  %v975 = vadd.f32 0.0, %v974
  %v976 = vpop.f32.mrb[0].mxu0
  %977 = vmatprep.mubr.bf16.mxu0 %v783
  %978 = vmatmul.mubr.bf16.gmra.mrb[0].mxu0 %v751
  %v979 = vpop.f32.mrb[0].mxu0
  %v980 = vadd.f32 0.0, %v979
  %v981 = vpop.f32.mrb[0].mxu0
  %v982 = vpop.f32.mrb[0].mxu0
  %v983 = vadd.f32 0.0, %v982
  %v984 = vpop.f32.mrb[0].mxu0
  %985 = vmatprep.mubr.bf16.mxu0 %v784
  %986 = vmatmul.mubr.bf16.gmra.mrb[0].mxu0 %v752
  %v987 = vpop.f32.mrb[0].mxu0
  %v988 = vadd.f32 0.0, %v987
  %v989 = vpop.f32.mrb[0].mxu0
  %v990 = vpop.f32.mrb[0].mxu0
  %v991 = vadd.f32 0.0, %v990
  %v992 = vpop.f32.mrb[0].mxu0
  %993 = vmatprep.mubr.bf16.mxu0 %v793
  %994 = vmatmul.mubr.bf16.gmra.mrb[0].mxu0 %v761
  %v995 = vpop.f32.mrb[0].mxu0
  %v996 = vadd.f32 0.0, %v995
  %v997 = vpop.f32.mrb[0].mxu0
  %v998 = vpop.f32.mrb[0].mxu0
  %v999 = vadd.f32 0.0, %v998
  %v1000 = vpop.f32.mrb[0].mxu0
  %1001 = vmatprep.mubr.bf16.mxu0 %v794
  %1002 = vmatmul.mubr.bf16.gmra.mrb[0].mxu0 %v762
  %v1003 = vpop.f32.mrb[0].mxu0
  %v1004 = vadd.f32 0.0, %v1003
  %v1005 = vpop.f32.mrb[0].mxu0
  %v1006 = vpop.f32.mrb[0].mxu0
  %v1007 = vadd.f32 0.0, %v1006
  %v1008 = vpop.f32.mrb[0].mxu0
  %1009 = vmatprep.mubr.bf16.mxu0 %v795
  %1010 = vmatmul.mubr.bf16.gmra.mrb[0].mxu0 %v763
  %v1011 = vpop.f32.mrb[0].mxu0
  %v1012 = vadd.f32 0.0, %v1011
  %v1013 = vpop.f32.mrb[0].mxu0
  %v1014 = vpop.f32.mrb[0].mxu0
  %v1015 = vadd.f32 0.0, %v1014
  %v1016 = vpop.f32.mrb[0].mxu0
  %1017 = vmatprep.mubr.bf16.mxu0 %v796
  %1018 = vmatmul.mubr.bf16.gmra.mrb[0].mxu0 %v764
  %v1019 = vpop.f32.mrb[0].mxu0
  %v1020 = vadd.f32 0.0, %v1019
  %v1021 = vpop.f32.mrb[0].mxu0
  %v1022 = vpop.f32.mrb[0].mxu0
  %v1023 = vadd.f32 0.0, %v1022
  %v1024 = vpop.f32.mrb[0].mxu0
  %1025 = vmatprep.mubr.bf16.mxu0 %v797
  %1026 = vmatmul.mubr.bf16.gmra.mrb[0].mxu0 %v765
  %v1027 = vpop.f32.mrb[0].mxu0
  %v1028 = vadd.f32 0.0, %v1027
  %v1029 = vpop.f32.mrb[0].mxu0
  %v1030 = vpop.f32.mrb[0].mxu0
  %v1031 = vadd.f32 0.0, %v1030
  %v1032 = vpop.f32.mrb[0].mxu0
  %1033 = vmatprep.mubr.bf16.mxu0 %v798
  %1034 = vmatmul.mubr.bf16.gmra.mrb[0].mxu0 %v766
  %v1035 = vpop.f32.mrb[0].mxu0
  %v1036 = vadd.f32 0.0, %v1035
  %v1037 = vpop.f32.mrb[0].mxu0
  %v1038 = vpop.f32.mrb[0].mxu0
  %v1039 = vadd.f32 0.0, %v1038
  %v1040 = vpop.f32.mrb[0].mxu0
  %1041 = vmatprep.mubr.bf16.mxu0 %v799
  %1042 = vmatmul.mubr.bf16.gmra.mrb[0].mxu0 %v767
  %v1043 = vpop.f32.mrb[0].mxu0
  %v1044 = vadd.f32 0.0, %v1043
  %v1045 = vpop.f32.mrb[0].mxu0
  %v1046 = vpop.f32.mrb[0].mxu0
  %v1047 = vadd.f32 0.0, %v1046
  %v1048 = vpop.f32.mrb[0].mxu0
  %1049 = vmatprep.mubr.bf16.mxu0 %v800
  %1050 = vmatmul.mubr.bf16.gmra.mrb[0].mxu0 %v768
  %v1051 = vpop.f32.mrb[0].mxu0
  %v1052 = vadd.f32 0.0, %v1051
  %v1053 = vpop.f32.mrb[0].mxu0
  %v1054 = vpop.f32.mrb[0].mxu0
  %v1055 = vadd.f32 0.0, %v1054
  %v1056 = vpop.f32.mrb[0].mxu0
  %1057 = vdwg.mxu0
  %v1058 = vadd.f32 %v673, %v932
  %v1059 = vadd.f32 %v674, %v935
  %v1060 = vadd.f32 %v675, %v940
  %v1061 = vadd.f32 %v676, %v943
  %v1062 = vadd.f32 %v677, %v948
  %v1063 = vadd.f32 %v678, %v951
  %v1064 = vadd.f32 %v679, %v956
  %v1065 = vadd.f32 %v680, %v959
  %v1066 = vadd.f32 %v681, %v964
  %v1067 = vadd.f32 %v682, %v967
  %v1068 = vadd.f32 %v683, %v972
  %v1069 = vadd.f32 %v684, %v975
  %v1070 = vadd.f32 %v685, %v980
  %v1071 = vadd.f32 %v686, %v983
  %v1072 = vadd.f32 %v687, %v988
  %v1073 = vadd.f32 %v688, %v991
  %v1074 = vadd.f32 %v689, %v996
  %v1075 = vadd.f32 %v690, %v999
  %v1076 = vadd.f32 %v691, %v1004
  %v1077 = vadd.f32 %v692, %v1007
  %v1078 = vadd.f32 %v693, %v1012
  %v1079 = vadd.f32 %v694, %v1015
  %v1080 = vadd.f32 %v695, %v1020
  %v1081 = vadd.f32 %v696, %v1023
  %v1082 = vadd.f32 %v697, %v1028
  %v1083 = vadd.f32 %v698, %v1031
  %v1084 = vadd.f32 %v699, %v1036
  %v1085 = vadd.f32 %v700, %v1039
  %v1086 = vadd.f32 %v701, %v1044
  %v1087 = vadd.f32 %v702, %v1047
  %v1088 = vadd.f32 %v703, %v1052
  %v1089 = vadd.f32 %v704, %v1055
  %1090 = vst [vmem:[%s672] sm:$0xff] %v1058
  %1091 = vst [vmem:[%s672 + $0x8] sm:$0xff] %v1059
  %1092 = vst [vmem:[%s672 + $0x10] sm:$0xff] %v1060
  %1093 = vst [vmem:[%s672 + $0x18] sm:$0xff] %v1061
  %1094 = vst [vmem:[%s672 + $0x20] sm:$0xff] %v1062
  %1095 = vst [vmem:[%s672 + $0x28] sm:$0xff] %v1063
  %1096 = vst [vmem:[%s672 + $0x30] sm:$0xff] %v1064
  %1097 = vst [vmem:[%s672 + $0x38] sm:$0xff] %v1065
  %1098 = vst [vmem:[%s672 + $0x40] sm:$0xff] %v1066
  %1099 = vst [vmem:[%s672 + $0x48] sm:$0xff] %v1067
  %1100 = vst [vmem:[%s672 + $0x50] sm:$0xff] %v1068
  %1101 = vst [vmem:[%s672 + $0x58] sm:$0xff] %v1069
  %1102 = vst [vmem:[%s672 + $0x60] sm:$0xff] %v1070
  %1103 = vst [vmem:[%s672 + $0x68] sm:$0xff] %v1071
  %1104 = vst [vmem:[%s672 + $0x70] sm:$0xff] %v1072
  %1105 = vst [vmem:[%s672 + $0x78] sm:$0xff] %v1073
  %1106 = vst [vmem:[%s672 + $0x80] sm:$0xff] %v1074
  %1107 = vst [vmem:[%s672 + $0x88] sm:$0xff] %v1075
  %1108 = vst [vmem:[%s672 + $0x90] sm:$0xff] %v1076
  %1109 = vst [vmem:[%s672 + $0x98] sm:$0xff] %v1077
  %1110 = vst [vmem:[%s672 + $0xa0] sm:$0xff] %v1078
  %1111 = vst [vmem:[%s672 + $0xa8] sm:$0xff] %v1079
  %1112 = vst [vmem:[%s672 + $0xb0] sm:$0xff] %v1080
  %1113 = vst [vmem:[%s672 + $0xb8] sm:$0xff] %v1081
  %1114 = vst [vmem:[%s672 + $0xc0] sm:$0xff] %v1082
  %1115 = vst [vmem:[%s672 + $0xc8] sm:$0xff] %v1083
  %1116 = vst [vmem:[%s672 + $0xd0] sm:$0xff] %v1084
  %1117 = vst [vmem:[%s672 + $0xd8] sm:$0xff] %v1085
  %1118 = vst [vmem:[%s672 + $0xe0] sm:$0xff] %v1086
  %1119 = vst [vmem:[%s672 + $0xe8] sm:$0xff] %v1087
  %1120 = vst [vmem:[%s672 + $0xf0] sm:$0xff] %v1088
  %1121 = vst [vmem:[%s672 + $0xf8] sm:$0xff] %v1089
  // Predicated region
  $region22: #{lightgcn_forward.2} parent=0 // pred_check
    _
  $region23: #{lightgcn_forward.2} parent=0 // pred_check_branch
    %1123 = sbr.rel (0) target = $region25
  $region24: #{lightgcn_forward.2} parent=0 // pred_region
    _
  $region25: #{lightgcn_forward.2} parent=0 // pred_fallthru
    _
  // Predicated region
  $region26: #{lightgcn_forward.2} parent=0 // pred_check
    _
  $region27: #{lightgcn_forward.2} parent=0 // pred_check_branch
    %1125 = sbr.rel (0) target = $region29
  $region28: #{lightgcn_forward.2} parent=0 // pred_region
    _
  $region29: #{lightgcn_forward.2} parent=0 // pred_fallthru
    _
  // Predicated region
  $region30: #{lightgcn_forward.2} parent=0 // pred_check
    _
  $region31: #{lightgcn_forward.2} parent=0 // pred_check_branch
    %1127 = sbr.rel (0) target = $region33
  $region32: #{lightgcn_forward.2} parent=0 // pred_region
    _
  $region33: #{lightgcn_forward.2} parent=0 // pred_fallthru
    _
  // Predicated region
  $region34: #{lightgcn_forward.2} parent=0 // pred_check
    _
  $region35: #{lightgcn_forward.2} parent=0 // pred_check_branch
    %1129 = sbr.rel (0) target = $region37
  $region36: #{lightgcn_forward.2} parent=0 // pred_region
    _
  $region37: #{lightgcn_forward.2} parent=0 // pred_fallthru
    _

</llo_original>
